<compile_context>
chip_gen: v7x
topology: tpu7x:2x2x1
jax: 0.10.0
libtpu: 0.0.40
codegen_flags: <defaults>
</compile_context>

<pallas_src>
import jax
import jax.numpy as jnp
from jax.experimental import pallas as pl
from jax.experimental.pallas import tpu as pltpu

IN_DIM = 784
H1 = 128
H2 = 64
N_CLASSES = 10
PADDED_CLASSES = 128        # lane-dense output width
NEG_BIAS = -1e9             # bias for padded (fake) classes -> exp() underflows to 0
MAX_TILE_N = 2048           # ~20 MiB live with double-buffered f32 x tile; safe on v5e/v6e/v7x
VMEM_LIMIT_BYTES = 64 << 20


def mlp_kernel(x_ref, w1_ref, b1_ref, w2_ref, b2_ref, w3_ref, b3_ref, out_ref):
    # Cast x to bf16 on the VPU (free) right before the MXU dot; x arrives as f32 so the
    # wrapper never writes an extra HBM copy of the dominant operand.
    x_bf = x_ref[...].astype(jnp.bfloat16)

    # Layer 1: (T, 784)bf16 @ (784, 128)bf16 -> f32, + bias, ReLU.
    v1 = jnp.dot(x_bf, w1_ref[...], preferred_element_type=jnp.float32)
    a1 = jnp.maximum(v1 + b1_ref[...], 0.0)

    # Layer 2: (T, 128) @ (128, 64) -> f32, + bias, ReLU.  Feed MXU bf16.
    v2 = jnp.dot(a1.astype(jnp.bfloat16), w2_ref[...],
                 preferred_element_type=jnp.float32)
    a2 = jnp.maximum(v2 + b2_ref[...], 0.0)

    # Layer 3: (T, 64) @ (64, 128) -> f32, + bias.  Columns 10..127 are fake classes
    # whose weights are 0 and bias is -1e9, so v3[:, 10:] == -1e9 exactly.
    v3 = jnp.dot(a2.astype(jnp.bfloat16), w3_ref[...],
                 preferred_element_type=jnp.float32)
    v3 = v3 + b3_ref[...]

    # Numerically stable log_softmax over the (padded) class axis, all in f32.  The
    # padded columns contribute exp(-1e9 - m) == 0 to the normalizer, so the real 10
    # classes get exactly the same log-probabilities as an unpadded softmax.
    m = jnp.max(v3, axis=1, keepdims=True)
    shifted = v3 - m
    lse = jnp.log(jnp.sum(jnp.exp(shifted), axis=1, keepdims=True))
    # Cast only on the store: bf16 writeback halves output HBM traffic.
    out_ref[...] = (shifted - lse).astype(out_ref.dtype)


def prepare_params(params):
    """One-time parameter prep (hoisted out of the per-call wrapper):
    bf16 weight casts + lane-dense padding of layer 3 to 128 classes."""
    w1, b1, w2, b2, w3, b3 = params

    w1_bf = w1.astype(jnp.bfloat16)
    w2_bf = w2.astype(jnp.bfloat16)

    w3_pad = jnp.zeros((H2, PADDED_CLASSES), jnp.float32).at[:, :N_CLASSES].set(w3)
    w3_bf = w3_pad.astype(jnp.bfloat16)
    b3_pad = jnp.full((1, PADDED_CLASSES), NEG_BIAS, jnp.float32).at[0, :N_CLASSES].set(b3)

    b1r = b1.reshape((1, H1)).astype(jnp.float32)
    b2r = b2.reshape((1, H2)).astype(jnp.float32)
    return (w1_bf, b1r, w2_bf, b2r, w3_bf, b3_pad)


def net_forward(x, prepared_params, *, max_tile_n=MAX_TILE_N):
    """x: (N, 1, 28, 28) or (N, 784). Returns (N, 10) f32 log-probabilities."""
    w1_bf, b1r, w2_bf, b2r, w3_bf, b3_pad = prepared_params
    n = x.shape[0]
    x2d = x.reshape((n, IN_DIM)).astype(jnp.float32)  # stream f32; cast in-kernel

    # Batch tiling.  Single block when the batch fits (block dim == full array dim is
    # always legal).  Otherwise the tile must be a multiple of 16 (bf16 output sublane
    # packing; also covers f32's 8); no wrapper-side pad -- Pallas pads the trailing
    # partial block on read and clips it on write.
    if n <= max_tile_n:
        tile_n = n
    else:
        tile_n = max(16, (max_tile_n // 16) * 16)
    grid = (pl.cdiv(n, tile_n),)

    def const_spec(shape):
        # Constant index_map -> operand kept resident in VMEM across grid steps.
        return pl.BlockSpec(shape, lambda i: (0, 0))

    out = pl.pallas_call(
        mlp_kernel,
        out_shape=jax.ShapeDtypeStruct((n, PADDED_CLASSES), jnp.bfloat16),
        grid=grid,
        in_specs=[
            pl.BlockSpec((tile_n, IN_DIM), lambda i: (i, 0)),   # x tile (pipelined)
            const_spec((IN_DIM, H1)),                           # W1 (bf16)
            const_spec((1, H1)),                                # b1 (f32)
            const_spec((H1, H2)),                               # W2 (bf16)
            const_spec((1, H2)),                                # b2 (f32)
            const_spec((H2, PADDED_CLASSES)),                   # W3 (bf16, padded)
            const_spec((1, PADDED_CLASSES)),                    # b3 (f32, padded)
        ],
        out_specs=pl.BlockSpec((tile_n, PADDED_CLASSES), lambda i: (i, 0)),
        compiler_params=pltpu.CompilerParams(
            dimension_semantics=("parallel",),      # v7x: shard batch tiles across 2 TCs
            vmem_limit_bytes=VMEM_LIMIT_BYTES,      # allow the 2048-row tile everywhere
        ),
    )(x2d, w1_bf, b1r, w2_bf, b2r, w3_bf, b3_pad)

    # Slice off the fake classes; upcast the tiny (n, 10) slab back to f32 downstream.
    return out[:, :N_CLASSES].astype(jnp.float32)


def net_forward_ref(x, params):
    """Pure-JAX reference with the same bf16-matmul / f32-accumulate recipe."""
    w1, b1, w2, b2, w3, b3 = params
    n = x.shape[0]
    x2d = x.reshape((n, IN_DIM)).astype(jnp.bfloat16)
    a1 = jax.nn.relu(
        jnp.dot(x2d, w1.astype(jnp.bfloat16), preferred_element_type=jnp.float32) + b1)
    a2 = jax.nn.relu(
        jnp.dot(a1.astype(jnp.bfloat16), w2.astype(jnp.bfloat16),
                preferred_element_type=jnp.float32) + b2)
    v3 = jnp.dot(a2.astype(jnp.bfloat16), w3.astype(jnp.bfloat16),
                 preferred_element_type=jnp.float32) + b3
    return jax.nn.log_softmax(v3, axis=1)


def init_params(key):
    """Deterministic init matching nn.Linear shapes; weights stored as (in, out)."""
    ks = jax.random.split(key, 6)

    def linear(kw, kb, fan_in, fan_out):
        bound = 1.0 / jnp.sqrt(fan_in)
        w = jax.random.uniform(kw, (fan_in, fan_out), jnp.float32, -bound, bound)
        b = jax.random.uniform(kb, (fan_out,), jnp.float32, -bound, bound)
        return w, b

    w1, b1 = linear(ks[0], ks[1], IN_DIM, H1)
    w2, b2 = linear(ks[2], ks[3], H1, H2)
    w3, b3 = linear(ks[4], ks[5], H2, N_CLASSES)
    return (w1, b1, w2, b2, w3, b3)


if __name__ == "__main__":
    key = jax.random.PRNGKey(0)
    k_params, k_x, k_x2 = jax.random.split(key, 3)

    params = init_params(k_params)
    prepared = prepare_params(params)

    # MNIST-like input: batch=8, 1x28x28 (flattens to 784).
    x = jax.random.normal(k_x, (8, 1, 28, 28), dtype=jnp.float32)

    out = net_forward(x, prepared)
    out = jax.block_until_ready(out)

    assert out.shape == (8, N_CLASSES)
    # log_softmax rows must exponentiate-sum to ~1 (padded classes must not leak in).
    # Tolerance is loose because the stored log-probs are bf16-rounded.
    row_sums = jnp.sum(jnp.exp(out), axis=1)
    assert jnp.allclose(row_sums, 1.0, atol=2e-2)
    # Match the pure-JAX reference (same bf16/f32 recipe) within a loose tolerance.
    ref = net_forward_ref(x, params)
    assert jnp.allclose(out, ref, atol=5e-2, rtol=5e-2)

    # Partial trailing block test: n % tile_n != 0 (grid of 2 tiles of 16 rows; only 9
    # valid rows in the last one -- OOB rows are discarded by the clipped output write).
    x_odd = jax.random.normal(k_x2, (25, 1, 28, 28), dtype=jnp.float32)
    out_odd = jax.block_until_ready(net_forward(x_odd, prepared, max_tile_n=16))
    assert out_odd.shape == (25, N_CLASSES)
    ref_odd = net_forward_ref(x_odd, params)
    assert jnp.allclose(out_odd, ref_odd, atol=5e-2, rtol=5e-2)
    assert jnp.allclose(jnp.sum(jnp.exp(out_odd), axis=1), 1.0, atol=2e-2)

    print("KERNEL_OK")
</pallas_src>

<mosaic_0001>
module attributes {stable_mosaic.version = 11 : i64} {
  func.func @mlp_kernel(%arg0: i32, %arg1: memref<8x784xf32, #tpu.memory_space<vmem>>, %arg2: memref<784x128xbf16, #tpu.memory_space<vmem>>, %arg3: memref<1x128xf32, #tpu.memory_space<vmem>>, %arg4: memref<128x64xbf16, #tpu.memory_space<vmem>>, %arg5: memref<1x64xf32, #tpu.memory_space<vmem>>, %arg6: memref<64x128xbf16, #tpu.memory_space<vmem>>, %arg7: memref<1x128xf32, #tpu.memory_space<vmem>>, %arg8: memref<8x128xbf16, #tpu.memory_space<vmem>>) attributes {dimension_semantics = [#tpu.dimension_semantics<parallel>], iteration_bounds = array<i64: 1>, scalar_prefetch = 0 : i64, scratch_operands = 0 : i64, tpu.core_type = #tpu.core_type<tc>, window_params = [{transform_indices = @transform_0, window_bounds = array<i64: 8, 784>}, {pipeline_mode = #tpu.pipeline_mode<synchronous>, transform_indices = @transform_1, window_bounds = array<i64: 784, 128>}, {pipeline_mode = #tpu.pipeline_mode<synchronous>, transform_indices = @transform_2, window_bounds = array<i64: 1, 128>}, {pipeline_mode = #tpu.pipeline_mode<synchronous>, transform_indices = @transform_3, window_bounds = array<i64: 128, 64>}, {pipeline_mode = #tpu.pipeline_mode<synchronous>, transform_indices = @transform_4, window_bounds = array<i64: 1, 64>}, {pipeline_mode = #tpu.pipeline_mode<synchronous>, transform_indices = @transform_5, window_bounds = array<i64: 64, 128>}, {pipeline_mode = #tpu.pipeline_mode<synchronous>, transform_indices = @transform_6, window_bounds = array<i64: 1, 128>}, {transform_indices = @transform_7, window_bounds = array<i64: 8, 128>}]} {
    %c0 = arith.constant 0 : index
    %c0_0 = arith.constant 0 : index
    %0 = vector.load %arg1[%c0, %c0_0] : memref<8x784xf32, #tpu.memory_space<vmem>>, vector<8x784xf32>
    %1 = arith.truncf %0 : vector<8x784xf32> to vector<8x784xbf16>
    %c0_1 = arith.constant 0 : index
    %c0_2 = arith.constant 0 : index
    %2 = vector.load %arg2[%c0_1, %c0_2] : memref<784x128xbf16, #tpu.memory_space<vmem>>, vector<784x128xbf16>
    %cst = arith.constant dense<0.000000e+00> : vector<8x128xf32>
    %3 = tpu.matmul %1, %2, %cst {dimension_numbers = #tpu.dot_dimension_numbers<[1], [0], [0], [1], [0, 0, 1, 1], [], []>} : vector<8x784xbf16>, vector<784x128xbf16>, vector<8x128xf32> -> vector<8x128xf32>
    %c0_3 = arith.constant 0 : index
    %c0_4 = arith.constant 0 : index
    %4 = vector.load %arg3[%c0_3, %c0_4] : memref<1x128xf32, #tpu.memory_space<vmem>>, vector<1x128xf32>
    %5 = vector.broadcast %4 : vector<1x128xf32> to vector<8x128xf32>
    %6 = arith.addf %3, %5 : vector<8x128xf32>
    %cst_5 = arith.constant 0.000000e+00 : f32
    %7 = vector.broadcast %cst_5 : f32 to vector<8x128xf32>
    %8 = arith.maximumf %6, %7 : vector<8x128xf32>
    %9 = arith.truncf %8 : vector<8x128xf32> to vector<8x128xbf16>
    %c0_6 = arith.constant 0 : index
    %c0_7 = arith.constant 0 : index
    %10 = vector.load %arg4[%c0_6, %c0_7] : memref<128x64xbf16, #tpu.memory_space<vmem>>, vector<128x64xbf16>
    %cst_8 = arith.constant dense<0.000000e+00> : vector<8x64xf32>
    %11 = tpu.matmul %9, %10, %cst_8 {dimension_numbers = #tpu.dot_dimension_numbers<[1], [0], [0], [1], [0, 0, 1, 1], [], []>} : vector<8x128xbf16>, vector<128x64xbf16>, vector<8x64xf32> -> vector<8x64xf32>
    %c0_9 = arith.constant 0 : index
    %c0_10 = arith.constant 0 : index
    %12 = vector.load %arg5[%c0_9, %c0_10] : memref<1x64xf32, #tpu.memory_space<vmem>>, vector<1x64xf32>
    %13 = vector.broadcast %12 : vector<1x64xf32> to vector<8x64xf32>
    %14 = arith.addf %11, %13 : vector<8x64xf32>
    %cst_11 = arith.constant 0.000000e+00 : f32
    %15 = vector.broadcast %cst_11 : f32 to vector<8x64xf32>
    %16 = arith.maximumf %14, %15 : vector<8x64xf32>
    %17 = arith.truncf %16 : vector<8x64xf32> to vector<8x64xbf16>
    %c0_12 = arith.constant 0 : index
    %c0_13 = arith.constant 0 : index
    %18 = vector.load %arg6[%c0_12, %c0_13] : memref<64x128xbf16, #tpu.memory_space<vmem>>, vector<64x128xbf16>
    %cst_14 = arith.constant dense<0.000000e+00> : vector<8x128xf32>
    %19 = tpu.matmul %17, %18, %cst_14 {dimension_numbers = #tpu.dot_dimension_numbers<[1], [0], [0], [1], [0, 0, 1, 1], [], []>} : vector<8x64xbf16>, vector<64x128xbf16>, vector<8x128xf32> -> vector<8x128xf32>
    %c0_15 = arith.constant 0 : index
    %c0_16 = arith.constant 0 : index
    %20 = vector.load %arg7[%c0_15, %c0_16] : memref<1x128xf32, #tpu.memory_space<vmem>>, vector<1x128xf32>
    %21 = vector.broadcast %20 : vector<1x128xf32> to vector<8x128xf32>
    %22 = arith.addf %19, %21 : vector<8x128xf32>
    %cst_17 = arith.constant dense<0xFF800000> : vector<8xf32>
    %23 = vector.multi_reduction <maximumf>, %22, %cst_17 [1] : vector<8x128xf32> to vector<8xf32>
    %24 = vector.shape_cast %23 : vector<8xf32> to vector<8x1xf32>
    %25 = vector.broadcast %24 : vector<8x1xf32> to vector<8x128xf32>
    %26 = arith.subf %22, %25 : vector<8x128xf32>
    %27 = math.exp %26 : vector<8x128xf32>
    %cst_18 = arith.constant dense<0.000000e+00> : vector<8xf32>
    %28 = vector.multi_reduction <add>, %27, %cst_18 [1] : vector<8x128xf32> to vector<8xf32>
    %29 = vector.shape_cast %28 : vector<8xf32> to vector<8x1xf32>
    %30 = math.log %29 : vector<8x1xf32>
    %31 = vector.broadcast %30 : vector<8x1xf32> to vector<8x128xf32>
    %32 = arith.subf %26, %31 : vector<8x128xf32>
    %33 = arith.truncf %32 : vector<8x128xf32> to vector<8x128xbf16>
    %c0_19 = arith.constant 0 : index
    %c0_20 = arith.constant 0 : index
    %34 = vector.load %arg8[%c0_19, %c0_20] : memref<8x128xbf16, #tpu.memory_space<vmem>>, vector<8x128xbf16>
    tpu.vector_store %arg8[%c0_19, %c0_20], %33 {strides = array<i32>} : memref<8x128xbf16, #tpu.memory_space<vmem>>, vector<8x128xbf16>,
    return
  }
  func.func @transform_0(%arg0: i32) -> (i32, i32) {
    %c0_i32 = arith.constant 0 : i32
    %c0_i32_0 = arith.constant 0 : i32
    return %arg0, %c0_i32 : i32, i32
  }
  func.func @transform_1(%arg0: i32) -> (i32, i32) {
    %c0_i32 = arith.constant 0 : i32
    %c0_i32_0 = arith.constant 0 : i32
    %c0_i32_1 = arith.constant 0 : i32
    return %c0_i32, %c0_i32_0 : i32, i32
  }
  func.func @transform_2(%arg0: i32) -> (i32, i32) {
    %c0_i32 = arith.constant 0 : i32
    %c0_i32_0 = arith.constant 0 : i32
    %c0_i32_1 = arith.constant 0 : i32
    return %c0_i32, %c0_i32_0 : i32, i32
  }
  func.func @transform_3(%arg0: i32) -> (i32, i32) {
    %c0_i32 = arith.constant 0 : i32
    %c0_i32_0 = arith.constant 0 : i32
    %c0_i32_1 = arith.constant 0 : i32
    return %c0_i32, %c0_i32_0 : i32, i32
  }
  func.func @transform_4(%arg0: i32) -> (i32, i32) {
    %c0_i32 = arith.constant 0 : i32
    %c0_i32_0 = arith.constant 0 : i32
    %c0_i32_1 = arith.constant 0 : i32
    return %c0_i32, %c0_i32_0 : i32, i32
  }
  func.func @transform_5(%arg0: i32) -> (i32, i32) {
    %c0_i32 = arith.constant 0 : i32
    %c0_i32_0 = arith.constant 0 : i32
    %c0_i32_1 = arith.constant 0 : i32
    return %c0_i32, %c0_i32_0 : i32, i32
  }
  func.func @transform_6(%arg0: i32) -> (i32, i32) {
    %c0_i32 = arith.constant 0 : i32
    %c0_i32_0 = arith.constant 0 : i32
    %c0_i32_1 = arith.constant 0 : i32
    return %c0_i32, %c0_i32_0 : i32, i32
  }
  func.func @transform_7(%arg0: i32) -> (i32, i32) {
    %c0_i32 = arith.constant 0 : i32
    %c0_i32_0 = arith.constant 0 : i32
    return %arg0, %c0_i32 : i32, i32
  }
}

</mosaic_0001>

<llo_original>
// kernel: tpu_custom_call.1
$region0: #{tpu_custom_call.1}
  #allocation0 [shape = 'u32[]', space=smem, size = 0x4, offset = 0x4, fixed_abs, tag = 'smem constant byte address 0x4 - core index']
  #allocation1 [shape = 'u32[144,128]{1,0:T(1,128)}', space=vmem, size = 0x12000, scoped, tag = 'internal scratch']
  %s0 = inlined_call_operand.hbm [shape: f32[8,784], index: 0, kind: input, shape index: {}]
  %s1 = inlined_call_operand.hbm [shape: bf16[784,128], index: 1, kind: input, shape index: {}]
  %s2 = inlined_call_operand.hbm [shape: f32[1,128], index: 2, kind: input, shape index: {}]
  %s3 = inlined_call_operand.hbm [shape: bf16[128,64], index: 3, kind: input, shape index: {}]
  %s4 = inlined_call_operand.hbm [shape: f32[1,64], index: 4, kind: input, shape index: {}]
  %s5 = inlined_call_operand.hbm [shape: bf16[64,128], index: 5, kind: input, shape index: {}]
  %s6 = inlined_call_operand.hbm [shape: f32[1,128], index: 6, kind: input, shape index: {}]
  %s7 = inlined_call_operand.hbm [shape: bf16[8,128], index: 7, kind: output, shape index: {}]
  %s8 = sld [smem:[#allocation0]]
  $region66: #{tpu_custom_call.1} parent=0
    _
  %s10 = ssub.s32 1, %s8
  %s11 = scalar_select 0, %s10, %s8
  $region1: #{tpu_custom_call.1} parent=0
    #allocation2 [shape = 'u8[28672]{0}', space=vmem, size = 0x7000, scoped, tag = 'input window, operand 0, single buffered']
    #allocation3 [shape = 's32[1]{0}', space=sflag, size = 0x4, scoped, tag = 'scoped memory for tpu_custom_call.1']
    #allocation4 [shape = 's32[1]{0}', space=sflag, size = 0x4, scoped, tag = 'scoped memory for tpu_custom_call.1']
    #allocation5 [shape = 'u8[200704]{0}', space=vmem, size = 0x31000, scoped, tag = 'input window, operand 1, single buffered']
    #allocation6 [shape = 's32[1]{0}', space=sflag, size = 0x4, scoped, tag = 'scoped memory for tpu_custom_call.1']
    #allocation7 [shape = 'u8[512]{0}', space=vmem, size = 0x400, scoped, tag = 'input window, operand 2, single buffered']
    #allocation8 [shape = 'u8[32768]{0}', space=vmem, size = 0x8000, scoped, tag = 'input window, operand 3, single buffered']
    #allocation9 [shape = 's32[1]{0}', space=sflag, size = 0x4, scoped, tag = 'scoped memory for tpu_custom_call.1']
    #allocation10 [shape = 'u8[512]{0}', space=vmem, size = 0x400, scoped, tag = 'input window, operand 4, single buffered']
    #allocation11 [shape = 'u8[16384]{0}', space=vmem, size = 0x4000, scoped, tag = 'input window, operand 5, single buffered']
    #allocation12 [shape = 's32[1]{0}', space=sflag, size = 0x4, scoped, tag = 'scoped memory for tpu_custom_call.1']
    #allocation13 [shape = 'u8[512]{0}', space=vmem, size = 0x400, scoped, tag = 'input window, operand 6, single buffered']
    #allocation14 [shape = 'u8[2048]{0}', space=vmem, size = 0x800, scoped, tag = 'output window, operand 0, single buffered']
    %12 = vsyncpa [#allocation3], 0
    %13 = vsyncpa [#allocation6], 0
    %14 = vsyncpa [#allocation9], 0
    %15 = vsyncpa [#allocation12], 0
    %16 = vsyncpa [#allocation4], 0
    // Predicated region
    $region2: #{tpu_custom_call.1} parent=1 // pred_check
      _
    $region3: #{tpu_custom_call.1} parent=1 // pred_check_branch
      %18 = sbr.rel (0) target = $region5
    $region4: #{tpu_custom_call.1} parent=1 // pred_region
      %s20 = ssub.s32 896, 896
      %21 = vsyncadd [#allocation3], %s20
      %s23 = sshll.u32 [#allocation2], 4
      %s24 = int_to_ptr.vmem [resolvable:$true] %s23
      %26 = dma.hbm_to_vmem [thread:$0]  %s0, 896, %s24, [#allocation3]
    $region5: #{tpu_custom_call.1} parent=1 // pred_fallthru
      _
    // Predicated region
    $region6: #{tpu_custom_call.1} parent=1 // pred_check
      _
    $region7: #{tpu_custom_call.1} parent=1 // pred_check_branch
      %28 = sbr.rel (0) target = $region9
    $region8: #{tpu_custom_call.1} parent=1 // pred_region
      %s30 = ssub.s32 6272, 6272
      %31 = vsyncadd [#allocation6], %s30
      %s32 = sshll.u32 [#allocation5], 4
      %s33 = int_to_ptr.vmem [resolvable:$true] %s32
      %38 = dma.hbm_to_vmem [thread:$0]  %s1, 6272, %s33, [#allocation6], 64, 64, 4
    $region9: #{tpu_custom_call.1} parent=1 // pred_fallthru
      _
    // Predicated region
    $region10: #{tpu_custom_call.1} parent=1 // pred_check
      _
    $region11: #{tpu_custom_call.1} parent=1 // pred_check_branch
      %40 = sbr.rel (0) target = $region13
    $region12: #{tpu_custom_call.1} parent=1 // pred_region
      %s42 = ssub.s32 16, 16
      %43 = vsyncadd [#allocation6], %s42
      %s45 = sshll.u32 [#allocation7], 4
      %s46 = int_to_ptr.vmem [resolvable:$true] %s45
      %48 = dma.hbm_to_vmem [thread:$0]  %s2, 16, %s46, [#allocation6]
    $region13: #{tpu_custom_call.1} parent=1 // pred_fallthru
      _
    // Predicated region
    $region14: #{tpu_custom_call.1} parent=1 // pred_check
      _
    $region15: #{tpu_custom_call.1} parent=1 // pred_check_branch
      %50 = sbr.rel (0) target = $region17
    $region16: #{tpu_custom_call.1} parent=1 // pred_region
      %s52 = ssub.s32 1024, 1024
      %53 = vsyncadd [#allocation9], %s52
      %s54 = sshll.u32 [#allocation8], 4
      %s55 = int_to_ptr.vmem [resolvable:$true] %s54
      %60 = dma.hbm_to_vmem [thread:$0]  %s3, 1024, %s55, [#allocation9], 64, 64, 4
    $region17: #{tpu_custom_call.1} parent=1 // pred_fallthru
      _
    // Predicated region
    $region18: #{tpu_custom_call.1} parent=1 // pred_check
      _
    $region19: #{tpu_custom_call.1} parent=1 // pred_check_branch
      %62 = sbr.rel (0) target = $region21
    $region20: #{tpu_custom_call.1} parent=1 // pred_region
      %s64 = ssub.s32 16, 16
      %65 = vsyncadd [#allocation9], %s64
      %s67 = sshll.u32 [#allocation10], 4
      %s68 = int_to_ptr.vmem [resolvable:$true] %s67
      %70 = dma.hbm_to_vmem [thread:$0]  %s4, 16, %s68, [#allocation9]
    $region21: #{tpu_custom_call.1} parent=1 // pred_fallthru
      _
    // Predicated region
    $region22: #{tpu_custom_call.1} parent=1 // pred_check
      _
    $region23: #{tpu_custom_call.1} parent=1 // pred_check_branch
      %72 = sbr.rel (0) target = $region25
    $region24: #{tpu_custom_call.1} parent=1 // pred_region
      %s74 = ssub.s32 512, 512
      %75 = vsyncadd [#allocation12], %s74
      %s76 = sshll.u32 [#allocation11], 4
      %s77 = int_to_ptr.vmem [resolvable:$true] %s76
      %82 = dma.hbm_to_vmem [thread:$0]  %s5, 512, %s77, [#allocation12], 64, 64, 4
    $region25: #{tpu_custom_call.1} parent=1 // pred_fallthru
      _
    // Predicated region
    $region26: #{tpu_custom_call.1} parent=1 // pred_check
      _
    $region27: #{tpu_custom_call.1} parent=1 // pred_check_branch
      %84 = sbr.rel (0) target = $region29
    $region28: #{tpu_custom_call.1} parent=1 // pred_region
      %s86 = ssub.s32 16, 16
      %87 = vsyncadd [#allocation12], %s86
      %s89 = sshll.u32 [#allocation13], 4
      %s90 = int_to_ptr.vmem [resolvable:$true] %s89
      %92 = dma.hbm_to_vmem [thread:$0]  %s6, 16, %s90, [#allocation12]
    $region29: #{tpu_custom_call.1} parent=1 // pred_fallthru
      _
    // Predicated region
    $region30: #{tpu_custom_call.1} parent=1 // pred_check
      _
    $region31: #{tpu_custom_call.1} parent=1 // pred_check_branch
      %94 = sbr.rel (0) target = $region33
    $region32: #{tpu_custom_call.1} parent=1 // pred_region
      %95 = dma.done [#allocation3], 896
    $region33: #{tpu_custom_call.1} parent=1 // pred_fallthru
      _
    // Predicated region
    $region34: #{tpu_custom_call.1} parent=1 // pred_check
      _
    $region35: #{tpu_custom_call.1} parent=1 // pred_check_branch
      %97 = sbr.rel (0) target = $region37
    $region36: #{tpu_custom_call.1} parent=1 // pred_region
      %98 = dma.done [#allocation6], 6272
    $region37: #{tpu_custom_call.1} parent=1 // pred_fallthru
      _
    // Predicated region
    $region38: #{tpu_custom_call.1} parent=1 // pred_check
      _
    $region39: #{tpu_custom_call.1} parent=1 // pred_check_branch
      %100 = sbr.rel (0) target = $region41
    $region40: #{tpu_custom_call.1} parent=1 // pred_region
      %101 = dma.done [#allocation6], 16
    $region41: #{tpu_custom_call.1} parent=1 // pred_fallthru
      _
    // Predicated region
    $region42: #{tpu_custom_call.1} parent=1 // pred_check
      _
    $region43: #{tpu_custom_call.1} parent=1 // pred_check_branch
      %103 = sbr.rel (0) target = $region45
    $region44: #{tpu_custom_call.1} parent=1 // pred_region
      %104 = dma.done [#allocation9], 1024
    $region45: #{tpu_custom_call.1} parent=1 // pred_fallthru
      _
    // Predicated region
    $region46: #{tpu_custom_call.1} parent=1 // pred_check
      _
    $region47: #{tpu_custom_call.1} parent=1 // pred_check_branch
      %106 = sbr.rel (0) target = $region49
    $region48: #{tpu_custom_call.1} parent=1 // pred_region
      %107 = dma.done [#allocation9], 16
    $region49: #{tpu_custom_call.1} parent=1 // pred_fallthru
      _
    // Predicated region
    $region50: #{tpu_custom_call.1} parent=1 // pred_check
      _
    $region51: #{tpu_custom_call.1} parent=1 // pred_check_branch
      %109 = sbr.rel (0) target = $region53
    $region52: #{tpu_custom_call.1} parent=1 // pred_region
      %110 = dma.done [#allocation12], 512
    $region53: #{tpu_custom_call.1} parent=1 // pred_fallthru
      _
    // Predicated region
    $region54: #{tpu_custom_call.1} parent=1 // pred_check
      _
    $region55: #{tpu_custom_call.1} parent=1 // pred_check_branch
      %112 = sbr.rel (0) target = $region57
    $region56: #{tpu_custom_call.1} parent=1 // pred_region
      %113 = dma.done [#allocation12], 16
    $region57: #{tpu_custom_call.1} parent=1 // pred_fallthru
      _
    %v115 = vld [vmem:[#allocation2] sm:$0xff]
    %v116 = vld [vmem:[#allocation2 + $0x8] sm:$0xff]
    %v117 = vld [vmem:[#allocation2 + $0x10] sm:$0xff]
    %v118 = vld [vmem:[#allocation2 + $0x18] sm:$0xff]
    %v119 = vld [vmem:[#allocation2 + $0x20] sm:$0xff]
    %v120 = vld [vmem:[#allocation2 + $0x28] sm:$0xff]
    %v121 = vld [vmem:[#allocation2 + $0x30] sm:$0xff]
    %v122 = vpack.c.bf16 %v115, %v115
    %v123 = vpack.c.bf16 %v116, %v116
    %v124 = vpack.c.bf16 %v117, %v117
    %v125 = vpack.c.bf16 %v118, %v118
    %v126 = vpack.c.bf16 %v119, %v119
    %v127 = vpack.c.bf16 %v120, %v120
    %v128 = vpack.c.bf16 %v121, %v121
    %v129 = vld [vmem:[#allocation5] sm:$0xf]
    %v130 = vld [vmem:[#allocation5 + $0x4] sm:$0xf]
    %v131 = vld [vmem:[#allocation5 + $0x8] sm:$0xf]
    %v132 = vld [vmem:[#allocation5 + $0xc] sm:$0xf]
    %v133 = vld [vmem:[#allocation5 + $0x10] sm:$0xf]
    %v134 = vld [vmem:[#allocation5 + $0x14] sm:$0xf]
    %v135 = vld [vmem:[#allocation5 + $0x18] sm:$0xf]
    %v136 = vld [vmem:[#allocation5 + $0x1c] sm:$0xf]
    %v137 = vld [vmem:[#allocation5 + $0x20] sm:$0xf]
    %v138 = vld [vmem:[#allocation5 + $0x24] sm:$0xf]
    %v139 = vld [vmem:[#allocation5 + $0x28] sm:$0xf]
    %v140 = vld [vmem:[#allocation5 + $0x2c] sm:$0xf]
    %v141 = vld [vmem:[#allocation5 + $0x30] sm:$0xf]
    %v142 = vld [vmem:[#allocation5 + $0x34] sm:$0xf]
    %v143 = vld [vmem:[#allocation5 + $0x38] sm:$0xf]
    %v144 = vld [vmem:[#allocation5 + $0x3c] sm:$0xf]
    %v145 = vld [vmem:[#allocation5 + $0x40] sm:$0xf]
    %v146 = vld [vmem:[#allocation5 + $0x44] sm:$0xf]
    %v147 = vld [vmem:[#allocation5 + $0x48] sm:$0xf]
    %v148 = vld [vmem:[#allocation5 + $0x4c] sm:$0xf]
    %v149 = vld [vmem:[#allocation5 + $0x50] sm:$0xf]
    %v150 = vld [vmem:[#allocation5 + $0x54] sm:$0xf]
    %v151 = vld [vmem:[#allocation5 + $0x58] sm:$0xf]
    %v152 = vld [vmem:[#allocation5 + $0x5c] sm:$0xf]
    %v153 = vld [vmem:[#allocation5 + $0x60] sm:$0xf]
    %v154 = vld [vmem:[#allocation5 + $0x64] sm:$0xf]
    %v155 = vld [vmem:[#allocation5 + $0x68] sm:$0xf]
    %v156 = vld [vmem:[#allocation5 + $0x6c] sm:$0xf]
    %v157 = vld [vmem:[#allocation5 + $0x70] sm:$0xf]
    %v158 = vld [vmem:[#allocation5 + $0x74] sm:$0xf]
    %v159 = vld [vmem:[#allocation5 + $0x78] sm:$0xf]
    %v160 = vld [vmem:[#allocation5 + $0x7c] sm:$0xf]
    %v161 = vld [vmem:[#allocation5 + $0x80] sm:$0xf]
    %v162 = vld [vmem:[#allocation5 + $0x84] sm:$0xf]
    %v163 = vld [vmem:[#allocation5 + $0x88] sm:$0xf]
    %v164 = vld [vmem:[#allocation5 + $0x8c] sm:$0xf]
    %v165 = vld [vmem:[#allocation5 + $0x90] sm:$0xf]
    %v166 = vld [vmem:[#allocation5 + $0x94] sm:$0xf]
    %v167 = vld [vmem:[#allocation5 + $0x98] sm:$0xf]
    %v168 = vld [vmem:[#allocation5 + $0x9c] sm:$0xf]
    %v169 = vld [vmem:[#allocation5 + $0xa0] sm:$0xf]
    %v170 = vld [vmem:[#allocation5 + $0xa4] sm:$0xf]
    %v171 = vld [vmem:[#allocation5 + $0xa8] sm:$0xf]
    %v172 = vld [vmem:[#allocation5 + $0xac] sm:$0xf]
    %v173 = vld [vmem:[#allocation5 + $0xb0] sm:$0xf]
    %v174 = vld [vmem:[#allocation5 + $0xb4] sm:$0xf]
    %v175 = vld [vmem:[#allocation5 + $0xb8] sm:$0xf]
    %v176 = vld [vmem:[#allocation5 + $0xbc] sm:$0xf]
    %v177 = vld [vmem:[#allocation5 + $0xc0] sm:$0xf]
    %v178 = vld [vmem:[#allocation5 + $0xc4] sm:$0xf]
    %v179 = vld [vmem:[#allocation5 + $0xc8] sm:$0xf]
    %v180 = vld [vmem:[#allocation5 + $0xcc] sm:$0xf]
    %v181 = vld [vmem:[#allocation5 + $0xd0] sm:$0xf]
    %v182 = vld [vmem:[#allocation5 + $0xd4] sm:$0xf]
    %v183 = vld [vmem:[#allocation5 + $0xd8] sm:$0xf]
    %v184 = vld [vmem:[#allocation5 + $0xdc] sm:$0xf]
    %v185 = vld [vmem:[#allocation5 + $0xe0] sm:$0xf]
    %v186 = vld [vmem:[#allocation5 + $0xe4] sm:$0xf]
    %v187 = vld [vmem:[#allocation5 + $0xe8] sm:$0xf]
    %v188 = vld [vmem:[#allocation5 + $0xec] sm:$0xf]
    %v189 = vld [vmem:[#allocation5 + $0xf0] sm:$0xf]
    %v190 = vld [vmem:[#allocation5 + $0xf4] sm:$0xf]
    %v191 = vld [vmem:[#allocation5 + $0xf8] sm:$0xf]
    %v192 = vld [vmem:[#allocation5 + $0xfc] sm:$0xf]
    %v193 = vld [vmem:[#allocation5 + $0x100] sm:$0xf]
    %v194 = vld [vmem:[#allocation5 + $0x104] sm:$0xf]
    %v195 = vld [vmem:[#allocation5 + $0x108] sm:$0xf]
    %v196 = vld [vmem:[#allocation5 + $0x10c] sm:$0xf]
    %v197 = vld [vmem:[#allocation5 + $0x110] sm:$0xf]
    %v198 = vld [vmem:[#allocation5 + $0x114] sm:$0xf]
    %v199 = vld [vmem:[#allocation5 + $0x118] sm:$0xf]
    %v200 = vld [vmem:[#allocation5 + $0x11c] sm:$0xf]
    %v201 = vld [vmem:[#allocation5 + $0x120] sm:$0xf]
    %v202 = vld [vmem:[#allocation5 + $0x124] sm:$0xf]
    %v203 = vld [vmem:[#allocation5 + $0x128] sm:$0xf]
    %v204 = vld [vmem:[#allocation5 + $0x12c] sm:$0xf]
    %v205 = vld [vmem:[#allocation5 + $0x130] sm:$0xf]
    %v206 = vld [vmem:[#allocation5 + $0x134] sm:$0xf]
    %v207 = vld [vmem:[#allocation5 + $0x138] sm:$0xf]
    %v208 = vld [vmem:[#allocation5 + $0x13c] sm:$0xf]
    %v209 = vld [vmem:[#allocation5 + $0x140] sm:$0xf]
    %v210 = vld [vmem:[#allocation5 + $0x144] sm:$0xf]
    %v211 = vld [vmem:[#allocation5 + $0x148] sm:$0xf]
    %v212 = vld [vmem:[#allocation5 + $0x14c] sm:$0xf]
    %v213 = vld [vmem:[#allocation5 + $0x150] sm:$0xf]
    %v214 = vld [vmem:[#allocation5 + $0x154] sm:$0xf]
    %v215 = vld [vmem:[#allocation5 + $0x158] sm:$0xf]
    %v216 = vld [vmem:[#allocation5 + $0x15c] sm:$0xf]
    %v217 = vld [vmem:[#allocation5 + $0x160] sm:$0xf]
    %v218 = vld [vmem:[#allocation5 + $0x164] sm:$0xf]
    %v219 = vld [vmem:[#allocation5 + $0x168] sm:$0xf]
    %v220 = vld [vmem:[#allocation5 + $0x16c] sm:$0xf]
    %v221 = vld [vmem:[#allocation5 + $0x170] sm:$0xf]
    %v222 = vld [vmem:[#allocation5 + $0x174] sm:$0xf]
    %v223 = vld [vmem:[#allocation5 + $0x178] sm:$0xf]
    %v224 = vld [vmem:[#allocation5 + $0x17c] sm:$0xf]
    %v225 = vld [vmem:[#allocation5 + $0x180] sm:$0xf]
    %v226 = vld [vmem:[#allocation5 + $0x184] sm:$0xf]
    %v227 = vld [vmem:[#allocation7] sm:$0x1]
    %v229 = vlaneseq
    %v230 = vshrl.u32 %v229, 7
    %v231 = vsub.s32 0, %v230
    %v232 = vrot.slane %v227, %v231
    %v332 = vunpack.c.l.b16 %v129
    %v333 = vunpack.c.l.b16 %v130
    %v334 = vunpack.c.l.b16 %v131
    %v335 = vunpack.c.l.b16 %v132
    %v336 = vunpack.c.l.b16 %v133
    %v337 = vunpack.c.l.b16 %v134
    %v338 = vunpack.c.l.b16 %v135
    %v339 = vunpack.c.l.b16 %v136
    %v340 = vunpack.c.l.b16 %v137
    %v341 = vunpack.c.l.b16 %v138
    %v342 = vunpack.c.l.b16 %v139
    %v343 = vunpack.c.l.b16 %v140
    %v344 = vunpack.c.l.b16 %v141
    %v345 = vunpack.c.l.b16 %v142
    %v346 = vunpack.c.l.b16 %v143
    %v347 = vunpack.c.l.b16 %v144
    %v348 = vunpack.c.l.b16 %v145
    %v349 = vunpack.c.l.b16 %v146
    %v350 = vunpack.c.l.b16 %v147
    %v351 = vunpack.c.l.b16 %v148
    %v352 = vunpack.c.l.b16 %v149
    %v353 = vunpack.c.l.b16 %v150
    %v354 = vunpack.c.l.b16 %v151
    %v355 = vunpack.c.l.b16 %v152
    %v356 = vunpack.c.l.b16 %v153
    %v357 = vunpack.c.l.b16 %v154
    %v358 = vunpack.c.l.b16 %v155
    %v359 = vunpack.c.l.b16 %v156
    %v360 = vunpack.c.l.b16 %v157
    %v361 = vunpack.c.l.b16 %v158
    %v362 = vunpack.c.l.b16 %v159
    %v363 = vunpack.c.l.b16 %v160
    %v364 = vunpack.c.l.b16 %v161
    %v365 = vunpack.c.l.b16 %v162
    %v366 = vunpack.c.l.b16 %v163
    %v367 = vunpack.c.l.b16 %v164
    %v368 = vunpack.c.l.b16 %v165
    %v369 = vunpack.c.l.b16 %v166
    %v370 = vunpack.c.l.b16 %v167
    %v371 = vunpack.c.l.b16 %v168
    %v372 = vunpack.c.l.b16 %v169
    %v373 = vunpack.c.l.b16 %v170
    %v374 = vunpack.c.l.b16 %v171
    %v375 = vunpack.c.l.b16 %v172
    %v376 = vunpack.c.l.b16 %v173
    %v377 = vunpack.c.l.b16 %v174
    %v378 = vunpack.c.l.b16 %v175
    %v379 = vunpack.c.l.b16 %v176
    %v380 = vunpack.c.l.b16 %v177
    %v381 = vunpack.c.l.b16 %v178
    %v382 = vunpack.c.l.b16 %v179
    %v383 = vunpack.c.l.b16 %v180
    %v384 = vunpack.c.l.b16 %v181
    %v385 = vunpack.c.l.b16 %v182
    %v386 = vunpack.c.l.b16 %v183
    %v387 = vunpack.c.l.b16 %v184
    %v388 = vunpack.c.l.b16 %v185
    %v389 = vunpack.c.l.b16 %v186
    %v390 = vunpack.c.l.b16 %v187
    %v391 = vunpack.c.l.b16 %v188
    %v392 = vunpack.c.l.b16 %v189
    %v393 = vunpack.c.l.b16 %v190
    %v394 = vunpack.c.l.b16 %v191
    %v395 = vunpack.c.l.b16 %v192
    %v396 = vunpack.c.l.b16 %v193
    %v397 = vunpack.c.l.b16 %v194
    %v398 = vunpack.c.l.b16 %v195
    %v399 = vunpack.c.l.b16 %v196
    %v400 = vunpack.c.l.b16 %v197
    %v401 = vunpack.c.l.b16 %v198
    %v402 = vunpack.c.l.b16 %v199
    %v403 = vunpack.c.l.b16 %v200
    %v404 = vunpack.c.l.b16 %v201
    %v405 = vunpack.c.l.b16 %v202
    %v406 = vunpack.c.l.b16 %v203
    %v407 = vunpack.c.l.b16 %v204
    %v408 = vunpack.c.l.b16 %v205
    %v409 = vunpack.c.l.b16 %v206
    %v410 = vunpack.c.l.b16 %v207
    %v411 = vunpack.c.l.b16 %v208
    %v412 = vunpack.c.l.b16 %v209
    %v413 = vunpack.c.l.b16 %v210
    %v414 = vunpack.c.l.b16 %v211
    %v415 = vunpack.c.l.b16 %v212
    %v416 = vunpack.c.l.b16 %v213
    %v417 = vunpack.c.l.b16 %v214
    %v418 = vunpack.c.l.b16 %v215
    %v419 = vunpack.c.l.b16 %v216
    %v420 = vunpack.c.l.b16 %v217
    %v421 = vunpack.c.l.b16 %v218
    %v422 = vunpack.c.l.b16 %v219
    %v423 = vunpack.c.l.b16 %v220
    %v424 = vunpack.c.l.b16 %v221
    %v425 = vunpack.c.l.b16 %v222
    %v426 = vunpack.c.l.b16 %v223
    %v427 = vunpack.c.l.b16 %v224
    %v428 = vunpack.c.l.b16 %v225
    %v429 = vunpack.c.l.b16 %v226
    %v430 = vpack.c.b16 %v333, %v332
    %v431 = vpack.c.b16 %v335, %v334
    %v432 = vpack.c.b16 %v337, %v336
    %v433 = vpack.c.b16 %v339, %v338
    %v434 = vpack.c.b16 %v341, %v340
    %v435 = vpack.c.b16 %v343, %v342
    %v436 = vpack.c.b16 %v345, %v344
    %v437 = vpack.c.b16 %v347, %v346
    %v438 = vpack.c.b16 %v349, %v348
    %v439 = vpack.c.b16 %v351, %v350
    %v440 = vpack.c.b16 %v353, %v352
    %v441 = vpack.c.b16 %v355, %v354
    %v442 = vpack.c.b16 %v357, %v356
    %v443 = vpack.c.b16 %v359, %v358
    %v444 = vpack.c.b16 %v361, %v360
    %v445 = vpack.c.b16 %v363, %v362
    %v446 = vpack.c.b16 %v365, %v364
    %v447 = vpack.c.b16 %v367, %v366
    %v448 = vpack.c.b16 %v369, %v368
    %v449 = vpack.c.b16 %v371, %v370
    %v450 = vpack.c.b16 %v373, %v372
    %v451 = vpack.c.b16 %v375, %v374
    %v452 = vpack.c.b16 %v377, %v376
    %v453 = vpack.c.b16 %v379, %v378
    %v454 = vpack.c.b16 %v381, %v380
    %v455 = vpack.c.b16 %v383, %v382
    %v456 = vpack.c.b16 %v385, %v384
    %v457 = vpack.c.b16 %v387, %v386
    %v458 = vpack.c.b16 %v389, %v388
    %v459 = vpack.c.b16 %v391, %v390
    %v460 = vpack.c.b16 %v393, %v392
    %v461 = vpack.c.b16 %v395, %v394
    %v462 = vpack.c.b16 %v397, %v396
    %v463 = vpack.c.b16 %v399, %v398
    %v464 = vpack.c.b16 %v401, %v400
    %v465 = vpack.c.b16 %v403, %v402
    %v466 = vpack.c.b16 %v405, %v404
    %v467 = vpack.c.b16 %v407, %v406
    %v468 = vpack.c.b16 %v409, %v408
    %v469 = vpack.c.b16 %v411, %v410
    %v470 = vpack.c.b16 %v413, %v412
    %v471 = vpack.c.b16 %v415, %v414
    %v472 = vpack.c.b16 %v417, %v416
    %v473 = vpack.c.b16 %v419, %v418
    %v474 = vpack.c.b16 %v421, %v420
    %v475 = vpack.c.b16 %v423, %v422
    %v476 = vpack.c.b16 %v425, %v424
    %v477 = vpack.c.b16 %v427, %v426
    %v478 = vpack.c.b16 %v429, %v428
    %vm528 = vcmask 130048
    %v530 = vsel %vm528, %v128, 0
    %532 = vmatprep.subr.bf16.mxu0 0
    %533 = vmatpush1.bf16.msra.mxu0 %v430
    %534 = vmatprep.subr.bf16.mxu0 0
    %535 = vmatpush1.bf16.msra.mxu0 %v431
    %536 = vmatprep.subr.bf16.mxu0 0
    %537 = vmatpush1.bf16.msra.mxu0 %v432
    %538 = vmatprep.subr.bf16.mxu0 0
    %539 = vmatpush1.bf16.msra.mxu0 %v433
    %540 = vmatprep.subr.bf16.mxu0 0
    %541 = vmatpush1.bf16.msra.mxu0 %v434
    %542 = vmatprep.subr.bf16.mxu0 0
    %543 = vmatpush1.bf16.msra.mxu0 %v435
    %544 = vmatprep.subr.bf16.mxu0 0
    %545 = vmatpush1.bf16.msra.mxu0 %v436
    %546 = vmatprep.subr.bf16.mxu0 0
    %547 = vmatpush1.bf16.msra.mxu0 %v437
    %548 = vmatprep.subr.bf16.mxu0 0
    %549 = vmatpush1.bf16.msra.mxu0 %v438
    %550 = vmatprep.subr.bf16.mxu0 0
    %551 = vmatpush1.bf16.msra.mxu0 %v439
    %552 = vmatprep.subr.bf16.mxu0 0
    %553 = vmatpush1.bf16.msra.mxu0 %v440
    %554 = vmatprep.subr.bf16.mxu0 0
    %555 = vmatpush1.bf16.msra.mxu0 %v441
    %556 = vmatprep.subr.bf16.mxu0 0
    %557 = vmatpush1.bf16.msra.mxu0 %v442
    %558 = vmatprep.subr.bf16.mxu0 0
    %559 = vmatpush1.bf16.msra.mxu0 %v443
    %560 = vmatprep.subr.bf16.mxu0 0
    %561 = vmatpush1.bf16.msra.mxu0 %v444
    %562 = vmatprep.subr.bf16.mxu0 0
    %563 = vmatpush1.bf16.msra.mxu0 %v445
    %564 = vmatprep.mubr.bf16.mxu0 %v123
    %565 = vmatmul.mubr.bf16.gmra.mrb[0].mxu0 %v122
    %v566 = vpop.f32.mrb[0].mxu0
    %v567 = vadd.f32 %v232, %v566
    %v568 = vpop.f32.mrb[0].mxu0
    %v569 = vpop.f32.mrb[0].mxu0
    %v570 = vpop.f32.mrb[0].mxu0
    %571 = vdwg.mxu0
    %572 = vmatprep.subr.bf16.mxu0 0
    %573 = vmatpush1.bf16.msra.mxu0 %v446
    %574 = vmatprep.subr.bf16.mxu0 0
    %575 = vmatpush1.bf16.msra.mxu0 %v447
    %576 = vmatprep.subr.bf16.mxu0 0
    %577 = vmatpush1.bf16.msra.mxu0 %v448
    %578 = vmatprep.subr.bf16.mxu0 0
    %579 = vmatpush1.bf16.msra.mxu0 %v449
    %580 = vmatprep.subr.bf16.mxu0 0
    %581 = vmatpush1.bf16.msra.mxu0 %v450
    %582 = vmatprep.subr.bf16.mxu0 0
    %583 = vmatpush1.bf16.msra.mxu0 %v451
    %584 = vmatprep.subr.bf16.mxu0 0
    %585 = vmatpush1.bf16.msra.mxu0 %v452
    %586 = vmatprep.subr.bf16.mxu0 0
    %587 = vmatpush1.bf16.msra.mxu0 %v453
    %588 = vmatprep.subr.bf16.mxu0 0
    %589 = vmatpush1.bf16.msra.mxu0 %v454
    %590 = vmatprep.subr.bf16.mxu0 0
    %591 = vmatpush1.bf16.msra.mxu0 %v455
    %592 = vmatprep.subr.bf16.mxu0 0
    %593 = vmatpush1.bf16.msra.mxu0 %v456
    %594 = vmatprep.subr.bf16.mxu0 0
    %595 = vmatpush1.bf16.msra.mxu0 %v457
    %596 = vmatprep.subr.bf16.mxu0 0
    %597 = vmatpush1.bf16.msra.mxu0 %v458
    %598 = vmatprep.subr.bf16.mxu0 0
    %599 = vmatpush1.bf16.msra.mxu0 %v459
    %600 = vmatprep.subr.bf16.mxu0 0
    %601 = vmatpush1.bf16.msra.mxu0 %v460
    %602 = vmatprep.subr.bf16.mxu0 0
    %603 = vmatpush1.bf16.msra.mxu0 %v461
    %604 = vmatprep.mubr.bf16.mxu0 %v125
    %605 = vmatmul.mubr.bf16.gmra.mrb[0].mxu0 %v124
    %v606 = vpop.f32.mrb[0].mxu0
    %v607 = vadd.f32 %v567, %v606
    %v608 = vpop.f32.mrb[0].mxu0
    %v609 = vpop.f32.mrb[0].mxu0
    %v610 = vpop.f32.mrb[0].mxu0
    %611 = vdwg.mxu0
    %612 = vmatprep.subr.bf16.mxu0 0
    %613 = vmatpush1.bf16.msra.mxu0 %v462
    %614 = vmatprep.subr.bf16.mxu0 0
    %615 = vmatpush1.bf16.msra.mxu0 %v463
    %616 = vmatprep.subr.bf16.mxu0 0
    %617 = vmatpush1.bf16.msra.mxu0 %v464
    %618 = vmatprep.subr.bf16.mxu0 0
    %619 = vmatpush1.bf16.msra.mxu0 %v465
    %620 = vmatprep.subr.bf16.mxu0 0
    %621 = vmatpush1.bf16.msra.mxu0 %v466
    %622 = vmatprep.subr.bf16.mxu0 0
    %623 = vmatpush1.bf16.msra.mxu0 %v467
    %624 = vmatprep.subr.bf16.mxu0 0
    %625 = vmatpush1.bf16.msra.mxu0 %v468
    %626 = vmatprep.subr.bf16.mxu0 0
    %627 = vmatpush1.bf16.msra.mxu0 %v469
    %628 = vmatprep.subr.bf16.mxu0 0
    %629 = vmatpush1.bf16.msra.mxu0 %v470
    %630 = vmatprep.subr.bf16.mxu0 0
    %631 = vmatpush1.bf16.msra.mxu0 %v471
    %632 = vmatprep.subr.bf16.mxu0 0
    %633 = vmatpush1.bf16.msra.mxu0 %v472
    %634 = vmatprep.subr.bf16.mxu0 0
    %635 = vmatpush1.bf16.msra.mxu0 %v473
    %636 = vmatprep.subr.bf16.mxu0 0
    %637 = vmatpush1.bf16.msra.mxu0 %v474
    %638 = vmatprep.subr.bf16.mxu0 0
    %639 = vmatpush1.bf16.msra.mxu0 %v475
    %640 = vmatprep.subr.bf16.mxu0 0
    %641 = vmatpush1.bf16.msra.mxu0 %v476
    %642 = vmatprep.subr.bf16.mxu0 0
    %643 = vmatpush1.bf16.msra.mxu0 %v477
    %644 = vmatprep.mubr.bf16.mxu0 %v127
    %645 = vmatmul.mubr.bf16.gmra.mrb[0].mxu0 %v126
    %v646 = vpop.f32.mrb[0].mxu0
    %v647 = vadd.f32 %v607, %v646
    %v648 = vpop.f32.mrb[0].mxu0
    %v649 = vpop.f32.mrb[0].mxu0
    %v650 = vpop.f32.mrb[0].mxu0
    %651 = vdwg.mxu0
    %652 = vmatprep.subr.bf16.mxu0 0
    %653 = vmatpush1.bf16.msra.mxu0 %v478
    %654 = vmatprep.subr.bf16.mxu0 0
    %655 = vmatpush1.bf16.msra.mxu0 0
    %656 = vmatprep.subr.bf16.mxu0 0
    %657 = vmatpush1.bf16.msra.mxu0 0
    %658 = vmatprep.subr.bf16.mxu0 0
    %659 = vmatpush1.bf16.msra.mxu0 0
    %660 = vmatprep.subr.bf16.mxu0 0
    %661 = vmatpush1.bf16.msra.mxu0 0
    %662 = vmatprep.subr.bf16.mxu0 0
    %663 = vmatpush1.bf16.msra.mxu0 0
    %664 = vmatprep.subr.bf16.mxu0 0
    %665 = vmatpush1.bf16.msra.mxu0 0
    %666 = vmatprep.subr.bf16.mxu0 0
    %667 = vmatpush1.bf16.msra.mxu0 0
    %668 = vmatprep.subr.bf16.mxu0 0
    %669 = vmatpush1.bf16.msra.mxu0 0
    %670 = vmatprep.subr.bf16.mxu0 0
    %671 = vmatpush1.bf16.msra.mxu0 0
    %672 = vmatprep.subr.bf16.mxu0 0
    %673 = vmatpush1.bf16.msra.mxu0 0
    %674 = vmatprep.subr.bf16.mxu0 0
    %675 = vmatpush1.bf16.msra.mxu0 0
    %676 = vmatprep.subr.bf16.mxu0 0
    %677 = vmatpush1.bf16.msra.mxu0 0
    %678 = vmatprep.subr.bf16.mxu0 0
    %679 = vmatpush1.bf16.msra.mxu0 0
    %680 = vmatprep.subr.bf16.mxu0 0
    %681 = vmatpush1.bf16.msra.mxu0 0
    %682 = vmatprep.subr.bf16.mxu0 0
    %683 = vmatpush1.bf16.msra.mxu0 0
    %684 = vmatprep.mubr.bf16.mxu0 0
    %685 = vmatmul.mubr.bf16.gmra.mrb[0].mxu0 %v530
    %v686 = vpop.f32.mrb[0].mxu0
    %v687 = vadd.f32 %v647, %v686
    %v688 = vpop.f32.mrb[0].mxu0
    %v689 = vpop.f32.mrb[0].mxu0
    %v690 = vpop.f32.mrb[0].mxu0
    %691 = vdwg.mxu0
    %v692 = vmax.f32 %v687, 0.0
    %v693 = vpack.c.bf16 %v692, %v692
    %v694 = vld [vmem:[#allocation8] sm:$0xf]
    %v695 = vld [vmem:[#allocation8 + $0x4] sm:$0xf]
    %v696 = vld [vmem:[#allocation8 + $0x8] sm:$0xf]
    %v697 = vld [vmem:[#allocation8 + $0xc] sm:$0xf]
    %v698 = vld [vmem:[#allocation8 + $0x10] sm:$0xf]
    %v699 = vld [vmem:[#allocation8 + $0x14] sm:$0xf]
    %v700 = vld [vmem:[#allocation8 + $0x18] sm:$0xf]
    %v701 = vld [vmem:[#allocation8 + $0x1c] sm:$0xf]
    %v702 = vld [vmem:[#allocation8 + $0x20] sm:$0xf]
    %v703 = vld [vmem:[#allocation8 + $0x24] sm:$0xf]
    %v704 = vld [vmem:[#allocation8 + $0x28] sm:$0xf]
    %v705 = vld [vmem:[#allocation8 + $0x2c] sm:$0xf]
    %v706 = vld [vmem:[#allocation8 + $0x30] sm:$0xf]
    %v707 = vld [vmem:[#allocation8 + $0x34] sm:$0xf]
    %v708 = vld [vmem:[#allocation8 + $0x38] sm:$0xf]
    %v709 = vld [vmem:[#allocation8 + $0x3c] sm:$0xf]
    %v710 = vld [vmem:[#allocation10] sm:$0x1]
    %v712 = vlaneseq
    %v713 = vshrl.u32 %v712, 7
    %v714 = vsub.s32 0, %v713
    %v715 = vrot.slane %v710, %v714
    %v733 = vunpack.c.l.b16 %v694
    %v734 = vunpack.c.l.b16 %v695
    %v735 = vunpack.c.l.b16 %v696
    %v736 = vunpack.c.l.b16 %v697
    %v737 = vunpack.c.l.b16 %v698
    %v738 = vunpack.c.l.b16 %v699
    %v739 = vunpack.c.l.b16 %v700
    %v740 = vunpack.c.l.b16 %v701
    %v741 = vunpack.c.l.b16 %v702
    %v742 = vunpack.c.l.b16 %v703
    %v743 = vunpack.c.l.b16 %v704
    %v744 = vunpack.c.l.b16 %v705
    %v745 = vunpack.c.l.b16 %v706
    %v746 = vunpack.c.l.b16 %v707
    %v747 = vunpack.c.l.b16 %v708
    %v748 = vunpack.c.l.b16 %v709
    %v749 = vpack.c.b16 %v734, %v733
    %v750 = vpack.c.b16 %v736, %v735
    %v751 = vpack.c.b16 %v738, %v737
    %v752 = vpack.c.b16 %v740, %v739
    %v753 = vpack.c.b16 %v742, %v741
    %v754 = vpack.c.b16 %v744, %v743
    %v755 = vpack.c.b16 %v746, %v745
    %v756 = vpack.c.b16 %v748, %v747
    %765 = vmatprep.subr.bf16.mxu0 0
    %766 = vmatpush1.bf16.msra.mxu0 %v749
    %767 = vmatprep.subr.bf16.mxu0 0
    %768 = vmatpush1.bf16.msra.mxu0 %v750
    %769 = vmatprep.subr.bf16.mxu0 0
    %770 = vmatpush1.bf16.msra.mxu0 %v751
    %771 = vmatprep.subr.bf16.mxu0 0
    %772 = vmatpush1.bf16.msra.mxu0 %v752
    %773 = vmatprep.subr.bf16.mxu0 0
    %774 = vmatpush1.bf16.msra.mxu0 %v753
    %775 = vmatprep.subr.bf16.mxu0 0
    %776 = vmatpush1.bf16.msra.mxu0 %v754
    %777 = vmatprep.subr.bf16.mxu0 0
    %778 = vmatpush1.bf16.msra.mxu0 %v755
    %779 = vmatprep.subr.bf16.mxu0 0
    %780 = vmatpush1.bf16.msra.mxu0 %v756
    %781 = vmatprep.subr.bf16.mxu0 0
    %782 = vmatpush1.bf16.msra.mxu0 0
    %783 = vmatprep.subr.bf16.mxu0 0
    %784 = vmatpush1.bf16.msra.mxu0 0
    %785 = vmatprep.subr.bf16.mxu0 0
    %786 = vmatpush1.bf16.msra.mxu0 0
    %787 = vmatprep.subr.bf16.mxu0 0
    %788 = vmatpush1.bf16.msra.mxu0 0
    %789 = vmatprep.subr.bf16.mxu0 0
    %790 = vmatpush1.bf16.msra.mxu0 0
    %791 = vmatprep.subr.bf16.mxu0 0
    %792 = vmatpush1.bf16.msra.mxu0 0
    %793 = vmatprep.subr.bf16.mxu0 0
    %794 = vmatpush1.bf16.msra.mxu0 0
    %795 = vmatprep.subr.bf16.mxu0 0
    %796 = vmatpush1.bf16.msra.mxu0 0
    %797 = vmatprep.mubr.bf16.mxu0 0
    %798 = vmatmul.mubr.bf16.gmra.mrb[0].mxu0 %v693
    %v799 = vpop.f32.mrb[0].mxu0
    %v800 = vadd.f32 %v715, %v799
    %v801 = vpop.f32.mrb[0].mxu0
    %v802 = vpop.f32.mrb[0].mxu0
    %v803 = vpop.f32.mrb[0].mxu0
    %804 = vdwg.mxu0
    %v805 = vmax.f32 %v800, 0.0
    %v806 = vpack.c.bf16 %v805, %v805
    %v807 = vld [vmem:[#allocation11] sm:$0xf]
    %v808 = vld [vmem:[#allocation11 + $0x4] sm:$0xf]
    %v809 = vld [vmem:[#allocation11 + $0x8] sm:$0xf]
    %v810 = vld [vmem:[#allocation11 + $0xc] sm:$0xf]
    %v811 = vld [vmem:[#allocation11 + $0x10] sm:$0xf]
    %v812 = vld [vmem:[#allocation11 + $0x14] sm:$0xf]
    %v813 = vld [vmem:[#allocation11 + $0x18] sm:$0xf]
    %v814 = vld [vmem:[#allocation11 + $0x1c] sm:$0xf]
    %v815 = vld [vmem:[#allocation13] sm:$0x1]
    %v817 = vlaneseq
    %v818 = vshrl.u32 %v817, 7
    %v819 = vsub.s32 0, %v818
    %v820 = vrot.slane %v815, %v819
    %v830 = vunpack.c.l.b16 %v807
    %v831 = vunpack.c.l.b16 %v808
    %v832 = vunpack.c.l.b16 %v809
    %v833 = vunpack.c.l.b16 %v810
    %v834 = vunpack.c.l.b16 %v811
    %v835 = vunpack.c.l.b16 %v812
    %v836 = vunpack.c.l.b16 %v813
    %v837 = vunpack.c.l.b16 %v814
    %v838 = vpack.c.b16 %v831, %v830
    %v839 = vpack.c.b16 %v833, %v832
    %v840 = vpack.c.b16 %v835, %v834
    %v841 = vpack.c.b16 %v837, %v836
    %vm846 = vcmask 523264
    %v848 = vsel %vm846, %v806, 0
    %850 = vmatprep.subr.bf16.mxu0 0
    %851 = vmatpush1.bf16.msra.mxu0 %v838
    %852 = vmatprep.subr.bf16.mxu0 0
    %853 = vmatpush1.bf16.msra.mxu0 %v839
    %854 = vmatprep.subr.bf16.mxu0 0
    %855 = vmatpush1.bf16.msra.mxu0 %v840
    %856 = vmatprep.subr.bf16.mxu0 0
    %857 = vmatpush1.bf16.msra.mxu0 %v841
    %858 = vmatprep.subr.bf16.mxu0 0
    %859 = vmatpush1.bf16.msra.mxu0 0
    %860 = vmatprep.subr.bf16.mxu0 0
    %861 = vmatpush1.bf16.msra.mxu0 0
    %862 = vmatprep.subr.bf16.mxu0 0
    %863 = vmatpush1.bf16.msra.mxu0 0
    %864 = vmatprep.subr.bf16.mxu0 0
    %865 = vmatpush1.bf16.msra.mxu0 0
    %866 = vmatprep.subr.bf16.mxu0 0
    %867 = vmatpush1.bf16.msra.mxu0 0
    %868 = vmatprep.subr.bf16.mxu0 0
    %869 = vmatpush1.bf16.msra.mxu0 0
    %870 = vmatprep.subr.bf16.mxu0 0
    %871 = vmatpush1.bf16.msra.mxu0 0
    %872 = vmatprep.subr.bf16.mxu0 0
    %873 = vmatpush1.bf16.msra.mxu0 0
    %874 = vmatprep.subr.bf16.mxu0 0
    %875 = vmatpush1.bf16.msra.mxu0 0
    %876 = vmatprep.subr.bf16.mxu0 0
    %877 = vmatpush1.bf16.msra.mxu0 0
    %878 = vmatprep.subr.bf16.mxu0 0
    %879 = vmatpush1.bf16.msra.mxu0 0
    %880 = vmatprep.subr.bf16.mxu0 0
    %881 = vmatpush1.bf16.msra.mxu0 0
    %882 = vmatprep.mubr.bf16.mxu0 0
    %883 = vmatmul.mubr.bf16.gmra.mrb[0].mxu0 %v848
    %v884 = vpop.f32.mrb[0].mxu0
    %v885 = vadd.f32 %v820, %v884
    %v886 = vpop.f32.mrb[0].mxu0
    %v887 = vpop.f32.mrb[0].mxu0
    %v888 = vpop.f32.mrb[0].mxu0
    %889 = vdwg.mxu0
    %890 = vmax.xlane.f32.xlu0 %v885
    %v891 = vpop.xlane.xlu0 %890
    %v892 = vsub.f32 %v885, %v891
    %v893 = vmul.f32 %v892, 1.442695
    %v894 = vpow.pop %v893
    %895 = vadd.xlane.f32.xlu0 %v894
    %v896 = vpop.xlane.xlu0 %895
    %v897 = vlog2.pop %v896
    %v898 = vmul.f32 %v897, 0.6931472
    %v899 = vsub.f32 %v892, %v898
    %v900 = vpack.c.bf16 %v899, %v899
    %901 = vst [vmem:[#allocation14] sm:$0xf] %v900
    // Predicated region
    $region58: #{tpu_custom_call.1} parent=1 // pred_check
      _
    $region59: #{tpu_custom_call.1} parent=1 // pred_check_branch
      %903 = sbr.rel (0) target = $region61
    $region60: #{tpu_custom_call.1} parent=1 // pred_region
      %s905 = ssub.s32 64, 64
      %906 = vsyncadd [#allocation4], %s905
      %s908 = sshll.u32 [#allocation14], 4
      %s909 = int_to_ptr.vmem [resolvable:$true] %s908
      %911 = dma.vmem_to_hbm [thread:$0]  %s909, 64, %s7, [#allocation4]
    $region61: #{tpu_custom_call.1} parent=1 // pred_fallthru
      _
    // Predicated region
    $region62: #{tpu_custom_call.1} parent=1 // pred_check
      _
    $region63: #{tpu_custom_call.1} parent=1 // pred_check_branch
      %913 = sbr.rel (0) target = $region65
    $region64: #{tpu_custom_call.1} parent=1 // pred_region
      %914 = dma.done [#allocation4], 64
    $region65: #{tpu_custom_call.1} parent=1 // pred_fallthru
      _
    %915 = vsyncpa [#allocation3], 1
    %916 = vsyncpa [#allocation6], 1
    %917 = vsyncpa [#allocation9], 1
    %918 = vsyncpa [#allocation12], 1
    %919 = vsyncpa [#allocation4], 1

</llo_original>
